<compile_context>
chip_gen: v5e
topology: v5e:2x2
jax: 0.10.0
libtpu: 0.0.40
codegen_flags: <defaults>
</compile_context>

<pallas_src>
import jax
import jax.numpy as jnp
from jax.experimental import pallas as pl
from jax.experimental.pallas import tpu as pltpu


def _round_up(x, m):
    return (x + m - 1) // m * m


def _choose_tiles(M, K, N, out_channels):
    """MXU-friendly, waste-minimizing tiles. Returns (M_pad, K_pad, N_pad, tm, tk, tn)."""
    # --- N: lane-dense output (>=128 -> unmasked stores, full MXU width).
    #     Keep a single j tile whenever N_pad <= 512 so the big (M, K) patch
    #     matrix is read from HBM exactly once.
    N_pad = _round_up(N, 128)
    tn = N_pad
    if N_pad > 512:
        for cand in (512, 256, 128):
            if N_pad % cand == 0 and cand % out_channels == 0:
                tn = cand
                break

    # --- M: pick the {512, 256, 128} tile minimizing zero-row padding waste;
    #     tiny problems just use the (8-aligned) full extent.
    M8 = _round_up(M, 8)
    if M8 <= 128:
        tm = M8
    else:
        tm, best_waste = 128, None
        for cand in (512, 256, 128):
            waste = _round_up(M, cand) - M
            if best_waste is None or waste < best_waste:
                tm, best_waste = cand, waste

    # --- K: single K step when it fits in one tile, else a big tk (fewer
    #     serial grid steps, better-amortized DMAs).  Zero-padded K rows are
    #     free in the accumulator.
    K128 = _round_up(K, 128)
    tk = K128 if K128 <= 1024 else 1024

    # --- VMEM budget (double-buffered, bf16 inputs).  Conservative 12 MiB so
    #     the same tiles fit the default scoped limits on v5e (16 MiB) and
    #     v7x (32 MiB default of 64 MiB physical).
    def footprint(tm_, tk_, tn_):
        dbuf = 2 * (tm_ * tk_ * 2      # p tile (bf16)
                    + tk_ * tn_ * 2    # w tile (bf16)
                    + tn_ * tn_ * 4    # group matrix (f32)
                    + tn_ * 4          # bias (f32)
                    + tm_ * tn_ * 4)   # output tile (f32)
        return dbuf + tm_ * tn_ * 4    # + f32 accumulator scratch

    budget = 12 * 1024 * 1024
    while footprint(tm, tk, tn) > budget and tk > 512:
        tk //= 2
    while footprint(tm, tk, tn) > budget and tm > 128:
        tm //= 2

    M_pad = _round_up(M, tm)
    K_pad = _round_up(K, tk)

    # --- v7x has 2 TensorCores; make sure the "parallel" axes expose >= 2
    #     blocks (costs nothing on single-core v5e/v6e).
    if (M_pad // tm) * (N_pad // tn) < 2:
        half = tm // 2
        if half >= 8 and half % 8 == 0:
            tm = half
            M_pad = _round_up(M, tm)

    return M_pad, K_pad, N_pad, tm, tk, tn


def _primary_caps_kernel(p_ref, w_ref, bias_ref, g_ref, o_ref, acc_ref):
    """Fused conv-as-matmul + bias + capsule squash.

    p_ref:    (tm, tk)  bf16 im2col patch tile
    w_ref:    (tk, tn)  bf16 weight tile
    bias_ref: (1,  tn)  f32 conv bias
    g_ref:    (tn, tn)  f32 0/1 block-diagonal capsule-group matrix (VMEM-resident)
    o_ref:    (tm, tn)  squashed output tile
    acc_ref:  (tm, tn)  f32 accumulator scratch (lives across the K grid axis)
    """
    kk = pl.program_id(2)

    @pl.when(kk == 0)
    def _():
        acc_ref[...] = jnp.zeros_like(acc_ref)

    acc_ref[...] += jnp.dot(
        p_ref[...], w_ref[...], preferred_element_type=jnp.float32
    )

    @pl.when(kk == pl.num_programs(2) - 1)
    def _():
        h = acc_ref[...] + bias_ref[...]
        # Per-capsule sum of squares, broadcast back to every channel of its
        # capsule, as one MXU matmul against the 0/1 group matrix.
        norm2 = jnp.dot(h * h, g_ref[...], preferred_element_type=jnp.float32)
        # squash: v * ||v||^2 / ((1+||v||^2) * ||v||)  ==  v * ||v|| / (1+||v||^2)
        # -> NaN-free by construction (0 at ||v||=0, incl. zero-padded rows/cols).
        scale = jnp.sqrt(norm2) * pl.reciprocal(1.0 + norm2, approx=True)
        o_ref[...] = (h * scale).astype(o_ref.dtype)


def primary_capsule_forward(x, weight, bias, *, n_units, out_channels, stride=1):
    """Pallas-backed PrimaryCapsuleLayer forward.

    x:      (b, in_channels, H, W)
    weight: (n_units*out_channels, in_channels, k, k)   (PyTorch Conv2d layout)
    bias:   (n_units*out_channels,)
    returns (b, n_units*hr*wr, out_channels)
    """
    b, c_in, H, W = x.shape
    c_out_total, c_in_w, kh, kw = weight.shape
    assert c_out_total == n_units * out_channels
    assert c_in_w == c_in and kh == kw
    k = kh
    hr = (H - k) // stride + 1
    wr = (W - k) // stride + 1

    M = b * hr * wr
    K = c_in * k * k
    N = n_units * out_channels

    M_pad, K_pad, N_pad, tm, tk, tn = _choose_tiles(M, K, N, out_channels)

    # ---- im2col (layout plumbing only; all FLOPs run inside the kernel).
    # Cast to bf16 up front so the materialized patch matrix is half-size.
    # TODO(synk): fold patch extraction into the kernel (pl.ANY + strided DMA
    # over the k*k taps) to remove the ~k^2/stride^2 HBM amplification of
    # im2col at production scale.
    x_bf = x.astype(jnp.bfloat16)
    patches = []
    for ih in range(k):
        for iw in range(k):
            patches.append(
                jax.lax.slice(
                    x_bf,
                    (0, 0, ih, iw),
                    (b, c_in, ih + stride * (hr - 1) + 1, iw + stride * (wr - 1) + 1),
                    (1, 1, stride, stride),
                )
            )  # (b, c_in, hr, wr)
    p = jnp.stack(patches, axis=2)            # (b, c_in, k*k, hr, wr)
    p = p.transpose(0, 3, 4, 1, 2)            # (b, hr, wr, c_in, k*k)
    p = p.reshape(M, K)

    w_mat = weight.reshape(N, K).T.astype(jnp.bfloat16)   # (K, N); K ordered (c_in, kh, kw)

    p_pad = jnp.pad(p, ((0, M_pad - M), (0, K_pad - K)))
    w_pad = jnp.pad(w_mat, ((0, K_pad - K), (0, N_pad - N)))
    bias_pad = jnp.pad(bias.astype(jnp.float32), (0, N_pad - N)).reshape(1, N_pad)

    # Single (tn, tn) 0/1 capsule-group block.  Every lane-aligned tn-wide
    # column tile has the same block-diagonal pattern (tn % out_channels == 0
    # when N is split, or tn == N_pad), so it is indexed at (0, 0) and stays
    # VMEM-resident.  Padded channels fall into their own groups and have
    # zero weights/bias, so they cannot contaminate real capsules and emit 0.
    grp = jnp.arange(tn) // out_channels
    g = (grp[:, None] == grp[None, :]).astype(jnp.float32)

    grid = (M_pad // tm, N_pad // tn, K_pad // tk)

    out = pl.pallas_call(
        _primary_caps_kernel,
        out_shape=jax.ShapeDtypeStruct((M_pad, N_pad), x.dtype),
        grid_spec=pltpu.PrefetchScalarGridSpec(
            num_scalar_prefetch=0,
            grid=grid,
            in_specs=[
                pl.BlockSpec((tm, tk), lambda i, j, kk: (i, kk)),
                pl.BlockSpec((tk, tn), lambda i, j, kk: (kk, j)),
                pl.BlockSpec((1, tn), lambda i, j, kk: (0, j)),
                pl.BlockSpec((tn, tn), lambda i, j, kk: (0, 0)),
            ],
            out_specs=pl.BlockSpec((tm, tn), lambda i, j, kk: (i, j)),
            scratch_shapes=[pltpu.VMEM((tm, tn), jnp.float32)],
        ),
        compiler_params=pltpu.CompilerParams(
            # "parallel" axes only pay off on v7x (2 TCs/chip); harmless elsewhere.
            dimension_semantics=("parallel", "parallel", "arbitrary"),
            vmem_limit_bytes=32 * 1024 * 1024,
        ),
    )(p_pad, w_pad, bias_pad, g)

    # Drop padding, then reorder (b, hr, wr, unit, c) -> (b, unit, hr, wr, c)
    # to match the PyTorch reshape/permute/reshape.
    out = out[:M, :N].reshape(b, hr, wr, n_units, out_channels)
    out = out.transpose(0, 3, 1, 2, 4)
    return out.reshape(b, n_units * hr * wr, out_channels)


def _primary_capsule_ref(x, weight, bias, *, n_units, out_channels, stride):
    """Pure-JAX reference reproducing the PyTorch module semantics."""
    hidden = jax.lax.conv_general_dilated(
        x, weight,
        window_strides=(stride, stride),
        padding="VALID",
        dimension_numbers=("NCHW", "OIHW", "NCHW"),
        precision=jax.lax.Precision.HIGHEST,
    )
    hidden = hidden + bias.reshape(1, -1, 1, 1)
    b, c, h, w = hidden.shape
    hidden = hidden.reshape(b, n_units, out_channels, h, w)
    hidden = jnp.transpose(hidden, (0, 1, 3, 4, 2))
    hidden = hidden.reshape(b, -1, out_channels)
    norm = jnp.linalg.norm(hidden, axis=2, keepdims=True)
    return hidden * norm ** 2 / ((1.0 + norm ** 2) * norm)


if __name__ == "__main__":
    # Small shapes consistent with the module: 9x9 kernel, stride 2,
    # n_units capsules of out_channels dims each.
    b, c_in, H, W = 2, 4, 16, 16
    n_units, out_channels, kernel_size, stride = 4, 8, 9, 2

    key = jax.random.PRNGKey(0)
    kx, kw_, kb = jax.random.split(key, 3)
    x = jax.random.normal(kx, (b, c_in, H, W), dtype=jnp.float32)
    weight = 0.1 * jax.random.normal(
        kw_, (n_units * out_channels, c_in, kernel_size, kernel_size),
        dtype=jnp.float32,
    )
    bias = 0.1 * jax.random.normal(kb, (n_units * out_channels,), dtype=jnp.float32)

    out = primary_capsule_forward(
        x, weight, bias, n_units=n_units, out_channels=out_channels, stride=stride
    )
    out = jax.block_until_ready(out)

    ref = _primary_capsule_ref(
        x, weight, bias, n_units=n_units, out_channels=out_channels, stride=stride
    )

    assert out.shape == ref.shape, (out.shape, ref.shape)
    assert jnp.allclose(out, ref, rtol=1e-2, atol=1e-2), float(
        jnp.max(jnp.abs(out - ref))
    )

    print("KERNEL_OK")
</pallas_src>

<mosaic_0001>
module attributes {stable_mosaic.version = 11 : i64} {
  func.func @_primary_caps_kernel(%arg0: i32, %arg1: i32, %arg2: i32, %arg3: memref<16x384xbf16, #tpu.memory_space<vmem>>, %arg4: memref<384x128xbf16, #tpu.memory_space<vmem>>, %arg5: memref<1x128xf32, #tpu.memory_space<vmem>>, %arg6: memref<128x128xf32, #tpu.memory_space<vmem>>, %arg7: memref<16x128xf32, #tpu.memory_space<vmem>>, %arg8: memref<16x128xf32, #tpu.memory_space<vmem>>) attributes {dimension_semantics = [#tpu.dimension_semantics<parallel>, #tpu.dimension_semantics<parallel>, #tpu.dimension_semantics<arbitrary>], iteration_bounds = array<i64: 2, 1, 1>, scalar_prefetch = 0 : i64, scratch_operands = 1 : i64, tpu.core_type = #tpu.core_type<tc>, window_params = [{transform_indices = @transform_0, window_bounds = array<i64: 16, 384>}, {transform_indices = @transform_1, window_bounds = array<i64: 384, 128>}, {transform_indices = @transform_2, window_bounds = array<i64: 1, 128>}, {pipeline_mode = #tpu.pipeline_mode<synchronous>, transform_indices = @transform_3, window_bounds = array<i64: 128, 128>}, {transform_indices = @transform_4, window_bounds = array<i64: 16, 128>}]} {
    %c0_i32 = arith.constant 0 : i32
    %0 = arith.cmpi eq, %arg2, %c0_i32 : i32
    %1 = arith.extui %0 : i1 to i32
    %c0_i32_0 = arith.constant 0 : i32
    %2 = arith.cmpi ne, %1, %c0_i32_0 : i32
    scf.if %2 {
      %cst_10 = arith.constant 0.000000e+00 : f32
      %12 = vector.broadcast %cst_10 : f32 to vector<16x128xf32>
      %c0_11 = arith.constant 0 : index
      %c0_12 = arith.constant 0 : index
      %13 = vector.load %arg8[%c0_11, %c0_12] : memref<16x128xf32, #tpu.memory_space<vmem>>, vector<16x128xf32>
      tpu.vector_store %arg8[%c0_11, %c0_12], %12 {strides = array<i32>} : memref<16x128xf32, #tpu.memory_space<vmem>>, vector<16x128xf32>,
    } else {
    }
    %c0 = arith.constant 0 : index
    %c0_1 = arith.constant 0 : index
    %3 = vector.load %arg8[%c0, %c0_1] : memref<16x128xf32, #tpu.memory_space<vmem>>, vector<16x128xf32>
    %c0_2 = arith.constant 0 : index
    %c0_3 = arith.constant 0 : index
    %4 = vector.load %arg3[%c0_2, %c0_3] : memref<16x384xbf16, #tpu.memory_space<vmem>>, vector<16x384xbf16>
    %c0_4 = arith.constant 0 : index
    %c0_5 = arith.constant 0 : index
    %5 = vector.load %arg4[%c0_4, %c0_5] : memref<384x128xbf16, #tpu.memory_space<vmem>>, vector<384x128xbf16>
    %cst = arith.constant dense<0.000000e+00> : vector<16x128xf32>
    %6 = tpu.matmul %4, %5, %cst {dimension_numbers = #tpu.dot_dimension_numbers<[1], [0], [0], [1], [0, 0, 1, 1], [], []>} : vector<16x384xbf16>, vector<384x128xbf16>, vector<16x128xf32> -> vector<16x128xf32>
    %7 = arith.addf %3, %6 : vector<16x128xf32>
    %c0_6 = arith.constant 0 : index
    %c0_7 = arith.constant 0 : index
    %8 = vector.load %arg8[%c0_6, %c0_7] : memref<16x128xf32, #tpu.memory_space<vmem>>, vector<16x128xf32>
    tpu.vector_store %arg8[%c0_6, %c0_7], %7 {strides = array<i32>} : memref<16x128xf32, #tpu.memory_space<vmem>>, vector<16x128xf32>,
    %c0_i32_8 = arith.constant 0 : i32
    %9 = arith.cmpi eq, %arg2, %c0_i32_8 : i32
    %10 = arith.extui %9 : i1 to i32
    %c0_i32_9 = arith.constant 0 : i32
    %11 = arith.cmpi ne, %10, %c0_i32_9 : i32
    scf.if %11 {
      %c0_10 = arith.constant 0 : index
      %c0_11 = arith.constant 0 : index
      %12 = vector.load %arg8[%c0_10, %c0_11] : memref<16x128xf32, #tpu.memory_space<vmem>>, vector<16x128xf32>
      %c0_12 = arith.constant 0 : index
      %c0_13 = arith.constant 0 : index
      %13 = vector.load %arg5[%c0_12, %c0_13] : memref<1x128xf32, #tpu.memory_space<vmem>>, vector<1x128xf32>
      %14 = vector.broadcast %13 : vector<1x128xf32> to vector<16x128xf32>
      %15 = arith.addf %12, %14 : vector<16x128xf32>
      %16 = arith.mulf %15, %15 : vector<16x128xf32>
      %c0_14 = arith.constant 0 : index
      %c0_15 = arith.constant 0 : index
      %17 = vector.load %arg6[%c0_14, %c0_15] : memref<128x128xf32, #tpu.memory_space<vmem>>, vector<128x128xf32>
      %cst_16 = arith.constant dense<0.000000e+00> : vector<16x128xf32>
      %18 = tpu.matmul %16, %17, %cst_16 {dimension_numbers = #tpu.dot_dimension_numbers<[1], [0], [0], [1], [0, 0, 1, 1], [], []>} : vector<16x128xf32>, vector<128x128xf32>, vector<16x128xf32> -> vector<16x128xf32>
      %19 = math.sqrt %18 : vector<16x128xf32>
      %cst_17 = arith.constant 1.000000e+00 : f32
      %20 = vector.broadcast %cst_17 : f32 to vector<16x128xf32>
      %21 = arith.addf %20, %18 : vector<16x128xf32>
      %22 = tpu.reciprocal %21 {approx = true} : vector<16x128xf32> -> vector<16x128xf32>
      %23 = arith.mulf %19, %22 : vector<16x128xf32>
      %24 = arith.mulf %15, %23 : vector<16x128xf32>
      %c0_18 = arith.constant 0 : index
      %c0_19 = arith.constant 0 : index
      %25 = vector.load %arg7[%c0_18, %c0_19] : memref<16x128xf32, #tpu.memory_space<vmem>>, vector<16x128xf32>
      tpu.vector_store %arg7[%c0_18, %c0_19], %24 {strides = array<i32>} : memref<16x128xf32, #tpu.memory_space<vmem>>, vector<16x128xf32>,
    } else {
    }
    return
  }
  func.func @transform_0(%arg0: i32, %arg1: i32, %arg2: i32) -> (i32, i32) {
    %c0_i32 = arith.constant 0 : i32
    return %arg0, %arg2 : i32, i32
  }
  func.func @transform_1(%arg0: i32, %arg1: i32, %arg2: i32) -> (i32, i32) {
    %c0_i32 = arith.constant 0 : i32
    return %arg2, %arg1 : i32, i32
  }
  func.func @transform_2(%arg0: i32, %arg1: i32, %arg2: i32) -> (i32, i32) {
    %c0_i32 = arith.constant 0 : i32
    %c0_i32_0 = arith.constant 0 : i32
    return %c0_i32, %arg1 : i32, i32
  }
  func.func @transform_3(%arg0: i32, %arg1: i32, %arg2: i32) -> (i32, i32) {
    %c0_i32 = arith.constant 0 : i32
    %c0_i32_0 = arith.constant 0 : i32
    %c0_i32_1 = arith.constant 0 : i32
    return %c0_i32, %c0_i32_0 : i32, i32
  }
  func.func @transform_4(%arg0: i32, %arg1: i32, %arg2: i32) -> (i32, i32) {
    %c0_i32 = arith.constant 0 : i32
    return %arg0, %arg1 : i32, i32
  }
}

</mosaic_0001>

<llo_original>
// kernel: tpu_custom_call.1
$region0: #{tpu_custom_call.1}
  #allocation0 [shape = 'u32[]', space=smem, size = 0x4, offset = 0x4, fixed_abs, tag = 'smem constant byte address 0x4 - core index']
  #allocation1 [shape = 'u32[72,128]{1,0:T(1,128)}', space=vmem, size = 0x9000, scoped, tag = 'internal scratch']
  #allocation2 [shape = 'f32[16,128]{1,0:T(8,128)}', space=vmem, size = 0x2000, scoped, tag = 'scratch operand']
  %s0 = inlined_call_operand.hbm [shape: bf16[32,384], index: 0, kind: input, shape index: {}]
  %s1 = inlined_call_operand.hbm [shape: bf16[384,128], index: 1, kind: input, shape index: {}]
  %s2 = inlined_call_operand.vmem [shape: f32[1,128], index: 2, kind: input, shape index: {}]
  %s3 = inlined_call_operand.hbm [shape: f32[128,128], index: 3, kind: input, shape index: {}]
  %s4 = inlined_call_operand.hbm [shape: f32[32,128], index: 4, kind: output, shape index: {}]
  %s5 = sld [smem:[#allocation0]]
  $region69: #{tpu_custom_call.1} parent=0
    _
  %s7 = ssub.s32 1, %s5
  %s8 = scalar_select 0, %s7, %s5
  $region1: #{tpu_custom_call.1} parent=0
    #allocation3 [shape = 'u8[24576]{0}', space=vmem, size = 0x6000, scoped, tag = 'input window, operand 0']
    #allocation4 [shape = 's32[2]{0}', space=sflag, size = 0x8, scoped, tag = 'scoped memory for tpu_custom_call.1']
    #allocation5 [shape = 's32[2]{0}', space=sflag, size = 0x8, scoped, tag = 'scoped memory for tpu_custom_call.1']
    #allocation6 [shape = 'u8[98304]{0}', space=vmem, size = 0x18000, scoped, tag = 'input window, operand 1, single buffered']
    #allocation7 [shape = 's32[1]{0}', space=sflag, size = 0x4, scoped, tag = 'scoped memory for tpu_custom_call.1']
    #allocation8 [shape = 'u8[65536]{0}', space=vmem, size = 0x10000, scoped, tag = 'input window, operand 3, single buffered']
    #allocation9 [shape = 'u8[16384]{0}', space=vmem, size = 0x4000, scoped, tag = 'output window, operand 0']
    %9 = vsyncpa [#allocation4], 0
    %s10 = scalar_lea.sflag [#allocation4], 1
    %11 = vsyncpa %s10, 0
    %12 = vsyncpa [#allocation7], 0
    %13 = vsyncpa [#allocation5], 0
    %s14 = scalar_lea.sflag [#allocation5], 1
    %15 = vsyncpa %s14, 0
    loop: start=0, step=1, limit=4
    $region2: #{tpu_custom_call.1} parent=1 // loop_pre_header
      _
    $region3: #{tpu_custom_call.1} parent=1 // loop_header
      %s17 = sphi 0, %s21
      %p18 = scmp.ge.s32.totalorder %s17, 4
      %s24 = sphi 0, %s43
      %s25 = sphi 0, %s39
      %s26 = sphi 0, %s35
      %s27 = sphi 0, %s24
      %s28 = sphi 0, %s25
      %s29 = sphi 0, %s26
      %s30 = sphi 0, %s27
      %s31 = sphi 0, %s28
      %s32 = sphi 0, %s29
      %s48 = sphi 0, %s50
      %s51 = sphi 0, %s48
      %s52 = sphi 0, %s51
      %s68 = sphi 0, %s52
      %s76 = sphi 0, %s78
      %s79 = sphi 0, %s76
      %s80 = sphi 0, %s79
      %s96 = sphi 0, %s80
      %s102 = sphi 0, %s104
      %s105 = sphi 0, %s102
      %s106 = sphi 0, %s105
      %s122 = sphi 0, %s106
      %s126 = sphi 0, %s126
      %s128 = sphi 0, %s126
      %s129 = sphi 0, %s128
      %s143 = sphi 0, %s129
      %s151 = sphi 0, %s153
      %s154 = sphi 0, %s151
      %s155 = sphi 0, %s154
      %s171 = sphi 0, %s155
    $region4: #{tpu_custom_call.1} parent=1 // loop_header_branch
      %20 = sbr.rel (%p18) target = $region8
    $region5: #{tpu_custom_call.1} parent=1 // loop_body
      %s22 = ssub.s32 %s17, 1
      %s23 = ssub.s32 %s17, 2
      %s33 = sadd.s32 1, %s26
      %p34 = scmp.ge.s32.totalorder %s33, 1
      %s35 = scalar_select %p34, 0, %s33
      %s36 = sadd.s32 1, %s25
      %s37 = scalar_select %p34, %s36, %s25
      %p38 = scmp.ge.s32.totalorder %s37, 1
      %s39 = scalar_select %p38, 0, %s37
      %s40 = sadd.s32 1, %s24
      %s41 = scalar_select %p38, %s40, %s24
      %p42 = scmp.ge.s32.totalorder %s41, 2
      %s43 = scalar_select %p42, 0, %s41
      %s44 = ssub.s32 %s24, %s43
      %s45 = ssub.s32 %s26, %s35
      %s46 = sor.u32 %s44, %s45
      %p47 = scmp.eq.s32.totalorder %s46, 0
      %s49 = sadd.s32 %s48, 1
      %s50 = scalar_select %p47, %s48, %s49
      %p53 = pneg %p47
      %p54 = scmp.eq.s32.totalorder %s17, 1
      %p55 = por %p53, %p54
      %p56 = scmp.ne.s32.totalorder %s48, %s51
      %p57 = scmp.eq.s32.totalorder %s17, 0
      %p58 = por %p56, %p57
      %p59 = scmp.ne.s32.totalorder %s48, %s51
      %p60 = scmp.eq.s32.totalorder %s22, 1
      %p61 = por %p59, %p60
      %p62 = scmp.ne.s32.totalorder %s51, %s52
      %p63 = scmp.eq.s32.totalorder %s22, 0
      %p64 = por %p62, %p63
      %p65 = scmp.ne.s32.totalorder %s51, %s52
      %p66 = scmp.eq.s32.totalorder %s23, 1
      %p67 = por %p65, %p66
      %p69 = scmp.ne.s32.totalorder %s52, %s68
      %p70 = scmp.eq.s32.totalorder %s23, 0
      %p71 = por %p69, %p70
      %s72 = ssub.s32 %s26, %s35
      %s73 = ssub.s32 %s25, %s39
      %s74 = sor.u32 %s72, %s73
      %p75 = scmp.eq.s32.totalorder %s74, 0
      %s77 = sadd.s32 %s76, 1
      %s78 = scalar_select %p75, %s76, %s77
      %p81 = pneg %p75
      %p82 = scmp.eq.s32.totalorder %s17, 1
      %p83 = por %p81, %p82
      %p84 = scmp.ne.s32.totalorder %s76, %s79
      %p85 = scmp.eq.s32.totalorder %s17, 0
      %p86 = por %p84, %p85
      %p87 = scmp.ne.s32.totalorder %s76, %s79
      %p88 = scmp.eq.s32.totalorder %s22, 1
      %p89 = por %p87, %p88
      %p90 = scmp.ne.s32.totalorder %s79, %s80
      %p91 = scmp.eq.s32.totalorder %s22, 0
      %p92 = por %p90, %p91
      %p93 = scmp.ne.s32.totalorder %s79, %s80
      %p94 = scmp.eq.s32.totalorder %s23, 1
      %p95 = por %p93, %p94
      %p97 = scmp.ne.s32.totalorder %s80, %s96
      %p98 = scmp.eq.s32.totalorder %s23, 0
      %p99 = por %p97, %p98
      %s100 = ssub.s32 %s25, %s39
      %p101 = scmp.eq.s32.totalorder %s100, 0
      %s103 = sadd.s32 %s102, 1
      %s104 = scalar_select %p101, %s102, %s103
      %p107 = pneg %p101
      %p108 = scmp.eq.s32.totalorder %s17, 1
      %p109 = por %p107, %p108
      %p110 = scmp.ne.s32.totalorder %s102, %s105
      %p111 = scmp.eq.s32.totalorder %s17, 0
      %p112 = por %p110, %p111
      %p113 = scmp.ne.s32.totalorder %s102, %s105
      %p114 = scmp.eq.s32.totalorder %s22, 1
      %p115 = por %p113, %p114
      %p116 = scmp.ne.s32.totalorder %s105, %s106
      %p117 = scmp.eq.s32.totalorder %s22, 0
      %p118 = por %p116, %p117
      %p119 = scmp.ne.s32.totalorder %s105, %s106
      %p120 = scmp.eq.s32.totalorder %s23, 1
      %p121 = por %p119, %p120
      %p123 = scmp.ne.s32.totalorder %s106, %s122
      %p124 = scmp.eq.s32.totalorder %s23, 0
      %p125 = por %p123, %p124
      %s127 = sadd.s32 %s126, 1
      %p130 = scmp.eq.s32.totalorder %s17, 1
      %p131 = scmp.ne.s32.totalorder %s126, %s128
      %p132 = scmp.eq.s32.totalorder %s17, 0
      %p133 = por %p131, %p132
      %p134 = scmp.ne.s32.totalorder %s126, %s128
      %p135 = scmp.eq.s32.totalorder %s22, 1
      %p136 = por %p134, %p135
      %p137 = scmp.ne.s32.totalorder %s128, %s129
      %p138 = scmp.eq.s32.totalorder %s22, 0
      %p139 = por %p137, %p138
      %p140 = scmp.ne.s32.totalorder %s128, %s129
      %p141 = scmp.eq.s32.totalorder %s23, 1
      %p142 = por %p140, %p141
      %p144 = scmp.ne.s32.totalorder %s129, %s143
      %p145 = scmp.eq.s32.totalorder %s23, 0
      %p146 = por %p144, %p145
      %s147 = ssub.s32 %s24, %s43
      %s148 = ssub.s32 %s25, %s39
      %s149 = sor.u32 %s147, %s148
      %p150 = scmp.eq.s32.totalorder %s149, 0
      %s152 = sadd.s32 %s151, 1
      %s153 = scalar_select %p150, %s151, %s152
      %p156 = pneg %p150
      %p157 = scmp.eq.s32.totalorder %s17, 1
      %p158 = por %p156, %p157
      %p159 = scmp.ne.s32.totalorder %s151, %s154
      %p160 = scmp.eq.s32.totalorder %s17, 0
      %p161 = por %p159, %p160
      %p162 = scmp.ne.s32.totalorder %s151, %s154
      %p163 = scmp.eq.s32.totalorder %s22, 1
      %p164 = por %p162, %p163
      %p165 = scmp.ne.s32.totalorder %s154, %s155
      %p166 = scmp.eq.s32.totalorder %s22, 0
      %p167 = por %p165, %p166
      %p168 = scmp.ne.s32.totalorder %s154, %s155
      %p169 = scmp.eq.s32.totalorder %s23, 1
      %p170 = por %p168, %p169
      %p172 = scmp.ne.s32.totalorder %s155, %s171
      %p173 = scmp.eq.s32.totalorder %s23, 0
      %p174 = por %p172, %p173
      %p175 = scmp.le.s32.totalorder 1, %s17
      %p176 = scmp.lt.s32.totalorder %s17, 3
      %p177 = pnand %p175, %p176
      %p178 = pneg %p177
      // Predicated region
      $region9: #{tpu_custom_call.1} parent=5 // pred_check
        _
      $region10: #{tpu_custom_call.1} parent=5 // pred_check_branch
        %180 = sbr.rel (%p177) target = $region12
      $region11: #{tpu_custom_call.1} parent=5 // pred_region
        %s181 = ssub.s32 %s17, 1
        // Predicated region
        $region13: #{tpu_custom_call.1} parent=11 // pred_check
          %p182 = pneg %p92
        $region14: #{tpu_custom_call.1} parent=11 // pred_check_branch
          %184 = sbr.rel (%p182) target = $region16
        $region15: #{tpu_custom_call.1} parent=11 // pred_region
          %s185 = smul.u32 48, %s29
          %187 = vsyncadd [#allocation7], 0
          %s188 = sadd.s32 %s28, %s185
          %s189 = smul.addr %s188, 4
          %s190 = scalar_lea.hbm %s1, %s189
          %s191 = sshll.u32 %s190, 4
          %s192 = int_to_ptr.hbm [resolvable:$true] %s191
          %s193 = sshll.u32 [#allocation6], 4
          %s194 = int_to_ptr.vmem [resolvable:$true] %s193
          %199 = dma.hbm_to_vmem [thread:$0]  %s192, 3072, %s194, [#allocation7], 64, 64, 4
        $region16: #{tpu_custom_call.1} parent=11 // pred_fallthru
          _
        // Predicated region
        $region17: #{tpu_custom_call.1} parent=11 // pred_check
          %p200 = pneg %p118
        $region18: #{tpu_custom_call.1} parent=11 // pred_check_branch
          %202 = sbr.rel (%p200) target = $region20
        $region19: #{tpu_custom_call.1} parent=11 // pred_region
          %p203 = scmp.lt.s32.totalorder %s28, 0
          %s204 = scalar_select %p203, %s28, 0
          %s205 = scalar_lea.vmem %s2, %s204
        $region20: #{tpu_custom_call.1} parent=11 // pred_fallthru
          _
        // Predicated region
        $region21: #{tpu_custom_call.1} parent=11 // pred_check
          %p206 = pneg %p139
        $region22: #{tpu_custom_call.1} parent=11 // pred_check_branch
          %208 = sbr.rel (%p206) target = $region24
        $region23: #{tpu_custom_call.1} parent=11 // pred_region
          %210 = vsyncadd [#allocation7], 0
          %s211 = sshll.u32 %s3, 4
          %s212 = int_to_ptr.hbm [resolvable:$true] %s211
          %s213 = sshll.u32 [#allocation8], 4
          %s214 = int_to_ptr.vmem [resolvable:$true] %s213
          %219 = dma.hbm_to_vmem [thread:$0]  %s212, 2048, %s214, [#allocation7], 128, 128, 8
        $region24: #{tpu_custom_call.1} parent=11 // pred_fallthru
          _
      $region12: #{tpu_custom_call.1} parent=5 // pred_fallthru
        _
      %p220 = scmp.lt.s32.totalorder %s17, 2
      // Predicated region
      $region25: #{tpu_custom_call.1} parent=5 // pred_check
        %p221 = pneg %p220
      $region26: #{tpu_custom_call.1} parent=5 // pred_check_branch
        %223 = sbr.rel (%p221) target = $region28
      $region27: #{tpu_custom_call.1} parent=5 // pred_region
        // Predicated region
        $region29: #{tpu_custom_call.1} parent=27 // pred_check
          %p224 = pneg %p58
        $region30: #{tpu_custom_call.1} parent=27 // pred_check_branch
          %226 = sbr.rel (%p224) target = $region32
        $region31: #{tpu_custom_call.1} parent=27 // pred_region
          %s227 = sand.u32 %s48, 1
          %s228 = scalar_lea.sflag [#allocation4], %s227
          %s229 = sand.u32 %s48, 1
          %s230 = smul.addr %s229, 24
          %s231 = scalar_lea.vmem [#allocation3], %s230
          %s232 = smul.u32 2, %s24
          %s233 = smul.u32 3, %s26
          %235 = vsyncadd %s228, 0
          %s236 = smul.addr %s232, 3
          %s237 = sadd.s32 %s233, %s236
          %s238 = smul.addr %s237, 4
          %s239 = scalar_lea.hbm %s0, %s238
          %s240 = sshll.u32 %s239, 4
          %s241 = int_to_ptr.hbm [resolvable:$true] %s240
          %s242 = sshll.u32 %s231, 4
          %s243 = int_to_ptr.vmem [resolvable:$true] %s242
          %248 = dma.hbm_to_vmem [thread:$0]  %s241, 384, %s243, %s228, 192, 192, 12
        $region32: #{tpu_custom_call.1} parent=27 // pred_fallthru
          _
      $region28: #{tpu_custom_call.1} parent=5 // pred_fallthru
        _
      %p249 = scmp.le.s32.totalorder 1, %s17
      %p250 = scmp.lt.s32.totalorder %s17, 3
      %p251 = pnand %p249, %p250
      %p252 = pneg %p251
      // Predicated region
      $region33: #{tpu_custom_call.1} parent=5 // pred_check
        _
      $region34: #{tpu_custom_call.1} parent=5 // pred_check_branch
        %254 = sbr.rel (%p251) target = $region36
      $region35: #{tpu_custom_call.1} parent=5 // pred_region
        %s255 = ssub.s32 %s17, 1
        %s256 = sand.u32 %s51, 1
        %s257 = scalar_lea.sflag [#allocation4], %s256
        %s258 = sand.u32 %s51, 1
        %s259 = smul.addr %s258, 24
        %s260 = scalar_lea.vmem [#allocation3], %s259
        // Predicated region
        $region37: #{tpu_custom_call.1} parent=35 // pred_check
          %p261 = pneg %p64
        $region38: #{tpu_custom_call.1} parent=35 // pred_check_branch
          %263 = sbr.rel (%p261) target = $region40
        $region39: #{tpu_custom_call.1} parent=35 // pred_region
          %265 = dma.done %s257, 384
        $region40: #{tpu_custom_call.1} parent=35 // pred_fallthru
          _
        // Predicated region
        $region41: #{tpu_custom_call.1} parent=35 // pred_check
          %p266 = pneg %p92
        $region42: #{tpu_custom_call.1} parent=35 // pred_check_branch
          %268 = sbr.rel (%p266) target = $region44
        $region43: #{tpu_custom_call.1} parent=35 // pred_region
          %270 = dma.done [#allocation7], 3072
        $region44: #{tpu_custom_call.1} parent=35 // pred_fallthru
          _
        // Predicated region
        $region45: #{tpu_custom_call.1} parent=35 // pred_check
          %p271 = pneg %p139
        $region46: #{tpu_custom_call.1} parent=35 // pred_check_branch
          %273 = sbr.rel (%p271) target = $region48
        $region47: #{tpu_custom_call.1} parent=35 // pred_region
          %275 = dma.done [#allocation7], 2048
        $region48: #{tpu_custom_call.1} parent=35 // pred_fallthru
          _
        %s276 = sand.u32 %s51, 1
        %s277 = scalar_lea.sflag [#allocation4], %s276
        %s278 = sand.u32 %s51, 1
        %s279 = smul.addr %s278, 24
        %s280 = scalar_lea.vmem [#allocation3], %s279
        %p281 = pneg %p64
        %p282 = pneg %p61
        %p283 = pneg %p92
        %p284 = pneg %p89
        %p285 = scmp.lt.s32.totalorder %s28, 0
        %s286 = scalar_select %p285, %s28, 0
        %s287 = scalar_lea.vmem %s2, %s286
        %p288 = pneg %p118
        %p289 = pneg %p115
        %p290 = pneg %p139
        %p291 = pneg %p136
        %p292 = pneg %p167
        %p293 = pneg %p164
        %s294 = sand.u32 %s154, 1
        %s295 = scalar_lea.sflag [#allocation5], %s294
        %s296 = sand.u32 %s154, 1
        %s297 = smul.addr %s296, 16
        %s298 = scalar_lea.vmem [#allocation9], %s297
        %s299 = smul.u32 2, %s27
        %s300 = smul.u32 3, %s29
        %s301 = smul.u32 48, %s29
        %p302 = scmp.lt.s32.totalorder %s28, 0
        %s303 = scalar_select %p302, %s28, 0
        %s304 = scalar_lea.vmem %s2, %s303
        %s305 = smul.u32 2, %s27
        %p306 = scmp.eq.s32.totalorder %s29, 0
        // Predicated region
        $region49: #{tpu_custom_call.1} parent=35 // pred_check
          %p307 = pneg %p306
        $region50: #{tpu_custom_call.1} parent=35 // pred_check_branch
          %309 = sbr.rel (%p307) target = $region52
        $region51: #{tpu_custom_call.1} parent=35 // pred_region
          %310 = vst [vmem:[#allocation2] sm:$0xff] 0.0
          %311 = vst [vmem:[#allocation2 + $0x8] sm:$0xff] 0.0
        $region52: #{tpu_custom_call.1} parent=35 // pred_fallthru
          _
        %v312 = vld [vmem:[#allocation2] sm:$0xff]
        %v313 = vld [vmem:[#allocation2 + $0x8] sm:$0xff]
        %v314 = vld [vmem:[%s260] sm:$0xff]
        %v315 = vld [vmem:[%s260 + $0x8] sm:$0xf]
        %v316 = vld [vmem:[%s260 + $0xc] sm:$0xff]
        %v317 = vld [vmem:[%s260 + $0x14] sm:$0xf]
        %v318 = vld [vmem:[#allocation6] sm:$0xf]
        %v319 = vld [vmem:[#allocation6 + $0x4] sm:$0xf]
        %v320 = vld [vmem:[#allocation6 + $0x8] sm:$0xf]
        %v321 = vld [vmem:[#allocation6 + $0xc] sm:$0xf]
        %v322 = vld [vmem:[#allocation6 + $0x10] sm:$0xf]
        %v323 = vld [vmem:[#allocation6 + $0x14] sm:$0xf]
        %v324 = vld [vmem:[#allocation6 + $0x18] sm:$0xf]
        %v325 = vld [vmem:[#allocation6 + $0x1c] sm:$0xf]
        %v326 = vld [vmem:[#allocation6 + $0x20] sm:$0xf]
        %v327 = vld [vmem:[#allocation6 + $0x24] sm:$0xf]
        %v328 = vld [vmem:[#allocation6 + $0x28] sm:$0xf]
        %v329 = vld [vmem:[#allocation6 + $0x2c] sm:$0xf]
        %v330 = vld [vmem:[#allocation6 + $0x30] sm:$0xf]
        %v331 = vld [vmem:[#allocation6 + $0x34] sm:$0xf]
        %v332 = vld [vmem:[#allocation6 + $0x38] sm:$0xf]
        %v333 = vld [vmem:[#allocation6 + $0x3c] sm:$0xf]
        %v334 = vld [vmem:[#allocation6 + $0x40] sm:$0xf]
        %v335 = vld [vmem:[#allocation6 + $0x44] sm:$0xf]
        %v336 = vld [vmem:[#allocation6 + $0x48] sm:$0xf]
        %v337 = vld [vmem:[#allocation6 + $0x4c] sm:$0xf]
        %v338 = vld [vmem:[#allocation6 + $0x50] sm:$0xf]
        %v339 = vld [vmem:[#allocation6 + $0x54] sm:$0xf]
        %v340 = vld [vmem:[#allocation6 + $0x58] sm:$0xf]
        %v341 = vld [vmem:[#allocation6 + $0x5c] sm:$0xf]
        %v342 = vld [vmem:[#allocation6 + $0x60] sm:$0xf]
        %v343 = vld [vmem:[#allocation6 + $0x64] sm:$0xf]
        %v344 = vld [vmem:[#allocation6 + $0x68] sm:$0xf]
        %v345 = vld [vmem:[#allocation6 + $0x6c] sm:$0xf]
        %v346 = vld [vmem:[#allocation6 + $0x70] sm:$0xf]
        %v347 = vld [vmem:[#allocation6 + $0x74] sm:$0xf]
        %v348 = vld [vmem:[#allocation6 + $0x78] sm:$0xf]
        %v349 = vld [vmem:[#allocation6 + $0x7c] sm:$0xf]
        %v350 = vld [vmem:[#allocation6 + $0x80] sm:$0xf]
        %v351 = vld [vmem:[#allocation6 + $0x84] sm:$0xf]
        %v352 = vld [vmem:[#allocation6 + $0x88] sm:$0xf]
        %v353 = vld [vmem:[#allocation6 + $0x8c] sm:$0xf]
        %v354 = vld [vmem:[#allocation6 + $0x90] sm:$0xf]
        %v355 = vld [vmem:[#allocation6 + $0x94] sm:$0xf]
        %v356 = vld [vmem:[#allocation6 + $0x98] sm:$0xf]
        %v357 = vld [vmem:[#allocation6 + $0x9c] sm:$0xf]
        %v358 = vld [vmem:[#allocation6 + $0xa0] sm:$0xf]
        %v359 = vld [vmem:[#allocation6 + $0xa4] sm:$0xf]
        %v360 = vld [vmem:[#allocation6 + $0xa8] sm:$0xf]
        %v361 = vld [vmem:[#allocation6 + $0xac] sm:$0xf]
        %v362 = vld [vmem:[#allocation6 + $0xb0] sm:$0xf]
        %v363 = vld [vmem:[#allocation6 + $0xb4] sm:$0xf]
        %v364 = vld [vmem:[#allocation6 + $0xb8] sm:$0xf]
        %v365 = vld [vmem:[#allocation6 + $0xbc] sm:$0xf]
        %v370 = vunpack.c.l.b16 %v314
        %v371 = vunpack.c.h.b16 %v314
        %v372 = vunpack.c.l.b16 %v315
        %v373 = vunpack.c.l.b16 %v316
        %v374 = vunpack.c.h.b16 %v316
        %v375 = vunpack.c.l.b16 %v317
        %v376 = vpack.c.b16 %v373, %v370
        %v377 = vpack.c.b16 %v374, %v371
        %v378 = vpack.c.b16 %v375, %v372
        %v430 = vunpack.c.l.b16 %v318
        %v431 = vunpack.c.l.b16 %v319
        %v432 = vunpack.c.l.b16 %v320
        %v433 = vunpack.c.l.b16 %v321
        %v434 = vunpack.c.l.b16 %v322
        %v435 = vunpack.c.l.b16 %v323
        %v436 = vunpack.c.l.b16 %v324
        %v437 = vunpack.c.l.b16 %v325
        %v438 = vunpack.c.l.b16 %v326
        %v439 = vunpack.c.l.b16 %v327
        %v440 = vunpack.c.l.b16 %v328
        %v441 = vunpack.c.l.b16 %v329
        %v442 = vunpack.c.l.b16 %v330
        %v443 = vunpack.c.l.b16 %v331
        %v444 = vunpack.c.l.b16 %v332
        %v445 = vunpack.c.l.b16 %v333
        %v446 = vunpack.c.l.b16 %v334
        %v447 = vunpack.c.l.b16 %v335
        %v448 = vunpack.c.l.b16 %v336
        %v449 = vunpack.c.l.b16 %v337
        %v450 = vunpack.c.l.b16 %v338
        %v451 = vunpack.c.l.b16 %v339
        %v452 = vunpack.c.l.b16 %v340
        %v453 = vunpack.c.l.b16 %v341
        %v454 = vunpack.c.l.b16 %v342
        %v455 = vunpack.c.l.b16 %v343
        %v456 = vunpack.c.l.b16 %v344
        %v457 = vunpack.c.l.b16 %v345
        %v458 = vunpack.c.l.b16 %v346
        %v459 = vunpack.c.l.b16 %v347
        %v460 = vunpack.c.l.b16 %v348
        %v461 = vunpack.c.l.b16 %v349
        %v462 = vunpack.c.l.b16 %v350
        %v463 = vunpack.c.l.b16 %v351
        %v464 = vunpack.c.l.b16 %v352
        %v465 = vunpack.c.l.b16 %v353
        %v466 = vunpack.c.l.b16 %v354
        %v467 = vunpack.c.l.b16 %v355
        %v468 = vunpack.c.l.b16 %v356
        %v469 = vunpack.c.l.b16 %v357
        %v470 = vunpack.c.l.b16 %v358
        %v471 = vunpack.c.l.b16 %v359
        %v472 = vunpack.c.l.b16 %v360
        %v473 = vunpack.c.l.b16 %v361
        %v474 = vunpack.c.l.b16 %v362
        %v475 = vunpack.c.l.b16 %v363
        %v476 = vunpack.c.l.b16 %v364
        %v477 = vunpack.c.l.b16 %v365
        %v478 = vpack.c.b16 %v431, %v430
        %v479 = vpack.c.b16 %v433, %v432
        %v480 = vpack.c.b16 %v435, %v434
        %v481 = vpack.c.b16 %v437, %v436
        %v482 = vpack.c.b16 %v439, %v438
        %v483 = vpack.c.b16 %v441, %v440
        %v484 = vpack.c.b16 %v443, %v442
        %v485 = vpack.c.b16 %v445, %v444
        %v486 = vpack.c.b16 %v447, %v446
        %v487 = vpack.c.b16 %v449, %v448
        %v488 = vpack.c.b16 %v451, %v450
        %v489 = vpack.c.b16 %v453, %v452
        %v490 = vpack.c.b16 %v455, %v454
        %v491 = vpack.c.b16 %v457, %v456
        %v492 = vpack.c.b16 %v459, %v458
        %v493 = vpack.c.b16 %v461, %v460
        %v494 = vpack.c.b16 %v463, %v462
        %v495 = vpack.c.b16 %v465, %v464
        %v496 = vpack.c.b16 %v467, %v466
        %v497 = vpack.c.b16 %v469, %v468
        %v498 = vpack.c.b16 %v471, %v470
        %v499 = vpack.c.b16 %v473, %v472
        %v500 = vpack.c.b16 %v475, %v474
        %v501 = vpack.c.b16 %v477, %v476
        %526 = vmatpush.bf16.msra.mxu0 %v485
        %527 = vmatpush.bf16.msra.mxu0 %v484
        %528 = vmatpush.bf16.msra.mxu0 %v483
        %529 = vmatpush.bf16.msra.mxu0 %v482
        %530 = vmatpush.bf16.msra.mxu0 %v481
        %531 = vmatpush.bf16.msra.mxu0 %v480
        %532 = vmatpush.bf16.msra.mxu0 %v479
        %533 = vmatpush.bf16.msra.mxu0 %v478
        %534 = vmatmul.bf16.gmra.mxu0 %v376
        %v535 = vpop.f32.mrf.mxu0
        %v536 = vadd.f32 0.0, %v535
        %v537 = vpop.f32.mrf.mxu0
        %v538 = vadd.f32 0.0, %v537
        %539 = vdwg.mxu0
        %540 = vmatpush.bf16.msra.mxu0 %v493
        %541 = vmatpush.bf16.msra.mxu0 %v492
        %542 = vmatpush.bf16.msra.mxu0 %v491
        %543 = vmatpush.bf16.msra.mxu0 %v490
        %544 = vmatpush.bf16.msra.mxu0 %v489
        %545 = vmatpush.bf16.msra.mxu0 %v488
        %546 = vmatpush.bf16.msra.mxu0 %v487
        %547 = vmatpush.bf16.msra.mxu0 %v486
        %548 = vmatmul.bf16.gmra.mxu0 %v377
        %v549 = vpop.f32.mrf.mxu0
        %v550 = vadd.f32 %v536, %v549
        %v551 = vpop.f32.mrf.mxu0
        %v552 = vadd.f32 %v538, %v551
        %553 = vdwg.mxu0
        %554 = vmatpush.bf16.msra.mxu0 %v501
        %555 = vmatpush.bf16.msra.mxu0 %v500
        %556 = vmatpush.bf16.msra.mxu0 %v499
        %557 = vmatpush.bf16.msra.mxu0 %v498
        %558 = vmatpush.bf16.msra.mxu0 %v497
        %559 = vmatpush.bf16.msra.mxu0 %v496
        %560 = vmatpush.bf16.msra.mxu0 %v495
        %561 = vmatpush.bf16.msra.mxu0 %v494
        %562 = vmatmul.bf16.gmra.mxu0 %v378
        %v563 = vpop.f32.mrf.mxu0
        %v564 = vadd.f32 %v550, %v563
        %v565 = vpop.f32.mrf.mxu0
        %v566 = vadd.f32 %v552, %v565
        %567 = vdwg.mxu0
        %v568 = vadd.f32 %v312, %v564
        %v569 = vadd.f32 %v313, %v566
        %570 = vst [vmem:[#allocation2] sm:$0xff] %v568
        %571 = vst [vmem:[#allocation2 + $0x8] sm:$0xff] %v569
        // Predicated region
        $region53: #{tpu_custom_call.1} parent=35 // pred_check
          %p572 = pneg %p306
        $region54: #{tpu_custom_call.1} parent=35 // pred_check_branch
          %574 = sbr.rel (%p572) target = $region56
        $region55: #{tpu_custom_call.1} parent=35 // pred_region
          %v575 = vld [vmem:[#allocation2] sm:$0xff]
          %v576 = vld [vmem:[#allocation2 + $0x8] sm:$0xff]
          %v577 = vld [vmem:[%s304] sm:$0x1]
          %v579 = vperm.slane %v577, 0
          %v581 = vadd.f32 %v575, %v579
          %v582 = vadd.f32 %v576, %v579
          %v583 = vmul.f32 %v581, %v581
          %v584 = vmul.f32 %v582, %v582
          %v585 = vld [vmem:[#allocation8] sm:$0xff]
          %v586 = vld [vmem:[#allocation8 + $0x8] sm:$0xff]
          %v587 = vld [vmem:[#allocation8 + $0x10] sm:$0xff]
          %v588 = vld [vmem:[#allocation8 + $0x18] sm:$0xff]
          %v589 = vld [vmem:[#allocation8 + $0x20] sm:$0xff]
          %v590 = vld [vmem:[#allocation8 + $0x28] sm:$0xff]
          %v591 = vld [vmem:[#allocation8 + $0x30] sm:$0xff]
          %v592 = vld [vmem:[#allocation8 + $0x38] sm:$0xff]
          %v593 = vld [vmem:[#allocation8 + $0x40] sm:$0xff]
          %v594 = vld [vmem:[#allocation8 + $0x48] sm:$0xff]
          %v595 = vld [vmem:[#allocation8 + $0x50] sm:$0xff]
          %v596 = vld [vmem:[#allocation8 + $0x58] sm:$0xff]
          %v597 = vld [vmem:[#allocation8 + $0x60] sm:$0xff]
          %v598 = vld [vmem:[#allocation8 + $0x68] sm:$0xff]
          %v599 = vld [vmem:[#allocation8 + $0x70] sm:$0xff]
          %v600 = vld [vmem:[#allocation8 + $0x78] sm:$0xff]
          %601 = vmatpush.msra.mxu0 %v600
          %602 = vmatpush.msra.mxu0 %v599
          %603 = vmatpush.msra.mxu0 %v598
          %604 = vmatpush.msra.mxu0 %v597
          %605 = vmatpush.msra.mxu0 %v596
          %606 = vmatpush.msra.mxu0 %v595
          %607 = vmatpush.msra.mxu0 %v594
          %608 = vmatpush.msra.mxu0 %v593
          %609 = vmatpush.msra.mxu0 %v592
          %610 = vmatpush.msra.mxu0 %v591
          %611 = vmatpush.msra.mxu0 %v590
          %612 = vmatpush.msra.mxu0 %v589
          %613 = vmatpush.msra.mxu0 %v588
          %614 = vmatpush.msra.mxu0 %v587
          %615 = vmatpush.msra.mxu0 %v586
          %616 = vmatpush.msra.mxu0 %v585
          %617 = vmatmul.f32.gmra.mxu0 %v583
          %v618 = vpop.f32.mrf.mxu0
          %v619 = vadd.f32 0.0, %v618
          %620 = vmatmul.f32.gmra.mxu0 %v584
          %v621 = vpop.f32.mrf.mxu0
          %v622 = vadd.f32 0.0, %v621
          %623 = vdwg.mxu0
          %v624 = vrsqrt.pop %v619
          %v625 = vmul.f32 %v624, %v619
          %v626 = vmul.f32 %v625, %v624
          %v627 = vmul.f32 0.5, %v626
          %v628 = vsub.f32 1.5, %v627
          %v629 = vmul.f32 %v624, %v628
          %v630 = vmul.f32 %v619, %v629
          %vm631 = vcmp.eq.f32.partialorder %v619, inf
          %v632 = vsel %vm631, %v619, %v630
          %vm633 = vcmp.eq.f32.partialorder %v619, 0.0
          %v634 = vand.u32 %v619, 2147483648
          %v635 = vsel %vm633, %v634, %v632
          %v636 = vrsqrt.pop %v622
          %v637 = vmul.f32 %v636, %v622
          %v638 = vmul.f32 %v637, %v636
          %v639 = vmul.f32 0.5, %v638
          %v640 = vsub.f32 1.5, %v639
          %v641 = vmul.f32 %v636, %v640
          %v642 = vmul.f32 %v622, %v641
          %vm643 = vcmp.eq.f32.partialorder %v622, inf
          %v644 = vsel %vm643, %v622, %v642
          %vm645 = vcmp.eq.f32.partialorder %v622, 0.0
          %v646 = vand.u32 %v622, 2147483648
          %v647 = vsel %vm645, %v646, %v644
          %v648 = vadd.f32 %v619, 1.0
          %v649 = vadd.f32 %v622, 1.0
          %v650 = vrcp.pop %v648
          %v651 = vrcp.pop %v649
          %v652 = vmul.f32 %v635, %v650
          %v653 = vmul.f32 %v647, %v651
          %v654 = vmul.f32 %v581, %v652
          %v655 = vmul.f32 %v582, %v653
          %656 = vst [vmem:[%s298] sm:$0xff] %v654
          %657 = vst [vmem:[%s298 + $0x8] sm:$0xff] %v655
        $region56: #{tpu_custom_call.1} parent=35 // pred_fallthru
          _
        %s658 = sand.u32 %s154, 1
        %s659 = scalar_lea.sflag [#allocation5], %s658
        %s660 = sand.u32 %s154, 1
        %s661 = smul.addr %s660, 16
        %s662 = scalar_lea.vmem [#allocation9], %s661
        // Predicated region
        $region57: #{tpu_custom_call.1} parent=35 // pred_check
          %p663 = pneg %p164
        $region58: #{tpu_custom_call.1} parent=35 // pred_check_branch
          %665 = sbr.rel (%p663) target = $region60
        $region59: #{tpu_custom_call.1} parent=35 // pred_region
          %s666 = smul.u32 2, %s27
          %668 = vsyncadd %s659, 0
          %s669 = sadd.s32 %s28, %s666
          %s670 = smul.addr %s669, 8
          %s671 = scalar_lea.hbm %s4, %s670
          %s672 = sshll.u32 %s662, 4
          %s673 = int_to_ptr.vmem [resolvable:$true] %s672
          %s674 = sshll.u32 %s671, 4
          %s675 = int_to_ptr.hbm [resolvable:$true] %s674
          %680 = dma.vmem_to_hbm [thread:$0]  %s673, 256, %s675, %s659, 128, 128, 8
        $region60: #{tpu_custom_call.1} parent=35 // pred_fallthru
          _
      $region36: #{tpu_custom_call.1} parent=5 // pred_fallthru
        _
      %p681 = scmp.le.s32.totalorder 2, %s17
      // Predicated region
      $region61: #{tpu_custom_call.1} parent=5 // pred_check
        %p682 = pneg %p681
      $region62: #{tpu_custom_call.1} parent=5 // pred_check_branch
        %684 = sbr.rel (%p682) target = $region64
      $region63: #{tpu_custom_call.1} parent=5 // pred_region
        %s685 = ssub.s32 %s17, 2
        // Predicated region
        $region65: #{tpu_custom_call.1} parent=63 // pred_check
          %p686 = pneg %p170
        $region66: #{tpu_custom_call.1} parent=63 // pred_check_branch
          %688 = sbr.rel (%p686) target = $region68
        $region67: #{tpu_custom_call.1} parent=63 // pred_region
          %s689 = sand.u32 %s155, 1
          %s690 = scalar_lea.sflag [#allocation5], %s689
          %s691 = sand.u32 %s155, 1
          %s692 = smul.addr %s691, 16
          %s693 = scalar_lea.vmem [#allocation9], %s692
          %695 = dma.done %s690, 256
        $region68: #{tpu_custom_call.1} parent=63 // pred_fallthru
          _
      $region64: #{tpu_custom_call.1} parent=5 // pred_fallthru
        _
    $region6: #{tpu_custom_call.1} parent=1 // loop_footer
      %s21 = sadd.s32 1, %s17
    $region7: #{tpu_custom_call.1} parent=1 // loop_footer_branch
      %16 = sbr.rel target = $region3
    $region8: #{tpu_custom_call.1} parent=1 // loop_exit
      _
    %696 = vsyncpa [#allocation4], 1
    %s697 = scalar_lea.sflag [#allocation4], 1
    %698 = vsyncpa %s697, 1
    %699 = vsyncpa [#allocation7], 1
    %700 = vsyncpa [#allocation5], 1
    %s701 = scalar_lea.sflag [#allocation5], 1
    %702 = vsyncpa %s701, 1

</llo_original>
